<compile_context>
chip_gen: v6e
topology: v6e:2x2x1
jax: 0.10.0
libtpu: 0.0.40
codegen_flags: <defaults>
</compile_context>

<pallas_src>
import functools

import jax
import jax.numpy as jnp
from jax import lax
from jax.experimental import pallas as pl
from jax.experimental.pallas import tpu as pltpu


def _pos_enc_kernel(x_ref, sp_ref, w2_ref, o_ref, *, mxu_precision):
    # x_ref : (1, C_in, tn) f32   input positions, channels-first
    # sp_ref: (F, C_in + 2) f32   [ w1*BN_scale | b1_folded | b2 ]
    # w2_ref: (F, F)              conv2 weight (bf16 or f32)
    # o_ref : (1, F, tn) f32      output in PyTorch (B, F, N) layout
    c_in = sp_ref.shape[1] - 2
    x = x_ref[0]                                  # (C_in, tn)
    b1 = sp_ref[:, c_in:c_in + 1]                 # (F, 1) conv1 bias (BN folded)
    b2 = sp_ref[:, c_in + 1:c_in + 2]             # (F, 1) conv2 bias

    # conv1 + folded eval-BN on the VPU: C_in broadcast FMAs (outer products),
    # accumulator initialized with the folded bias. No MXU pass wasted on K=3.
    h = b1 + sp_ref[:, 0:1] * x[0:1, :]           # (F, tn)
    for c in range(1, c_in):
        h = h + sp_ref[:, c:c + 1] * x[c:c + 1, :]
    h = jnp.maximum(h, 0.0)                       # ReLU

    # conv2 on the MXU (bf16 inputs by default, f32 accumulation).
    y = jnp.dot(w2_ref[...], h.astype(w2_ref.dtype),
                preferred_element_type=jnp.float32,
                precision=mxu_precision)
    o_ref[0] = (y + b2).astype(o_ref.dtype)


def _round_up(x, m):
    return ((x + m - 1) // m) * m


def position_encoding_learned(xyz, params, *, tn=4096, mxu_bf16=True):
    """xyz: (B, N, C_in) float32 -> (B, F, N) float32 (PyTorch layout)."""
    B, N, C_in = xyz.shape
    w1 = params["w1"]                              # (F, C_in)
    F = w1.shape[0]

    # Fold eval-mode BatchNorm1d into conv1 (exact algebra): BN(h) = s*h + t.
    inv_std = 1.0 / jnp.sqrt(params["running_var"] + params["eps"])
    s = params["gamma"] * inv_std                  # (F,)
    t = params["beta"] - params["running_mean"] * s
    w1f = w1 * s[:, None]                          # (F, C_in)
    b1f = params["b1"] * s + t                     # (F,)
    # Pack all small f32 params into one stream: [w1f | b1f | b2] -> (F, C_in+2)
    sp = jnp.concatenate(
        [w1f, b1f[:, None], params["b2"][:, None]], axis=1).astype(jnp.float32)

    w2 = params["w2"].astype(jnp.bfloat16 if mxu_bf16 else jnp.float32)
    mxu_precision = (lax.Precision.DEFAULT if mxu_bf16
                     else lax.Precision.HIGHEST)

    # Channels-first input (this IS the PyTorch xyz.transpose(1, 2)).
    xT = jnp.transpose(xyz, (0, 2, 1))             # (B, C_in, N)

    # Lane-dense tiles along N (multiple of 128). No wrapper pad / slice:
    # out_shape is the exact (B, F, N) and the edge tile is clipped by Pallas
    # (masked loads/stores), so OOB lanes never reach HBM. For small N this
    # collapses to one round_up(N,128)-wide tile per batch -> grid=(B, 1).
    tn = max(128, min(_round_up(N, 128), (tn // 128) * 128))
    n_tiles = pl.cdiv(N, tn)

    kernel = functools.partial(_pos_enc_kernel, mxu_precision=mxu_precision)

    return pl.pallas_call(
        kernel,
        out_shape=jax.ShapeDtypeStruct((B, F, N), jnp.float32),
        grid_spec=pltpu.PrefetchScalarGridSpec(
            num_scalar_prefetch=0,
            grid=(B, n_tiles),
            in_specs=[
                pl.BlockSpec((1, C_in, tn), lambda b, n: (b, 0, n)),
                pl.BlockSpec((F, C_in + 2), lambda b, n: (0, 0)),
                pl.BlockSpec((F, F), lambda b, n: (0, 0)),
            ],
            out_specs=pl.BlockSpec((1, F, tn), lambda b, n: (b, 0, n)),
        ),
        compiler_params=pltpu.CompilerParams(
            dimension_semantics=("parallel", "parallel"),
            # Blocks are <= ~2 MiB each at tn=4096, F=128; 32 MiB leaves ample
            # headroom on every generation incl. v7x (64 MiB physical VMEM).
            vmem_limit_bytes=32 * 1024 * 1024,
        ),
    )(xT, sp, w2)


def make_params(key, input_channel, num_pos_feats):
    """Deterministic synthetic parameters matching the module's shapes."""
    C, F = input_channel, num_pos_feats
    k1, k2, k3, k4, k5, k6 = jax.random.split(key, 6)
    # Conv1d(C, F, 1): weight (F, C, 1) -> stored squeezed as (F, C)
    w1 = jax.random.normal(k1, (F, C), jnp.float32) * 0.1
    b1 = jax.random.normal(k2, (F,), jnp.float32) * 0.1
    # BatchNorm1d(F) eval-mode params / running stats
    gamma = 1.0 + 0.05 * jax.random.normal(k3, (F,), jnp.float32)
    beta = 0.1 * jax.random.normal(k4, (F,), jnp.float32)
    running_mean = 0.05 * jnp.arange(F, dtype=jnp.float32) / F
    running_var = 1.0 + 0.02 * jnp.arange(F, dtype=jnp.float32) / F
    # Conv1d(F, F, 1): weight (F, F, 1) -> stored squeezed as (F_out, F_in)
    w2 = jax.random.normal(k5, (F, F), jnp.float32) * 0.1
    b2 = jax.random.normal(k6, (F,), jnp.float32) * 0.1
    return {"w1": w1, "b1": b1, "gamma": gamma, "beta": beta,
            "running_mean": running_mean, "running_var": running_var,
            "eps": 1e-5, "w2": w2, "b2": b2}


def reference(xyz, params):
    """Pure-JAX reference mirroring the PyTorch ops (unfused BN, f32)."""
    xT = jnp.transpose(xyz, (0, 2, 1))                            # (B, C, N)
    h = jnp.einsum("fc,bcn->bfn", params["w1"], xT,
                   precision=lax.Precision.HIGHEST)
    h = h + params["b1"][None, :, None]
    inv_std = 1.0 / jnp.sqrt(params["running_var"] + params["eps"])
    h = (h - params["running_mean"][None, :, None]) * inv_std[None, :, None]
    h = h * params["gamma"][None, :, None] + params["beta"][None, :, None]
    h = jnp.maximum(h, 0.0)
    y = jnp.einsum("fg,bgn->bfn", params["w2"], h,
                   precision=lax.Precision.HIGHEST)
    return y + params["b2"][None, :, None]


if __name__ == "__main__":
    key = jax.random.PRNGKey(0)
    kx1, kx2, kx3, kp1, kp2, kp3 = jax.random.split(key, 6)

    # Config 1: tiny (xyz coords C_in=3, F=32, N=16) — single clipped tile.
    B, N, C_in, F = 2, 16, 3, 32
    xyz = jax.random.normal(kx1, (B, N, C_in), jnp.float32)
    params = make_params(kp1, C_in, F)
    ref = reference(xyz, params)
    out_f32 = jax.block_until_ready(
        position_encoding_learned(xyz, params, mxu_bf16=False))
    assert out_f32.shape == (B, F, N), out_f32.shape
    assert jnp.allclose(out_f32, ref, atol=1e-5, rtol=1e-5)
    out_bf16 = jax.block_until_ready(position_encoding_learned(xyz, params))
    assert jnp.allclose(out_bf16, ref, atol=2e-2, rtol=2e-2)

    # Config 2: module default F=128, BEVFusion-ish N=300 — one lane-dense
    # 384-wide tile per batch, grid=(2, 1) (>=2 parallel steps for v7x).
    B2, N2, C2, F2 = 2, 300, 3, 128
    xyz2 = jax.random.normal(kx2, (B2, N2, C2), jnp.float32)
    params2 = make_params(kp2, C2, F2)
    ref2 = reference(xyz2, params2)
    out2_f32 = jax.block_until_ready(
        position_encoding_learned(xyz2, params2, mxu_bf16=False))
    assert out2_f32.shape == (B2, F2, N2), out2_f32.shape
    assert jnp.allclose(out2_f32, ref2, atol=1e-4, rtol=1e-4)
    out2 = jax.block_until_ready(position_encoding_learned(xyz2, params2))
    assert jnp.allclose(out2, ref2, atol=2e-2, rtol=2e-2)

    # Config 3: multi-tile N with a clipped edge tile (N=520, tn=256 -> 3 tiles,
    # last tile only 8 valid lanes) — exercises the no-pad/no-slice path.
    B3, N3, C3, F3 = 2, 520, 3, 128
    xyz3 = jax.random.normal(kx3, (B3, N3, C3), jnp.float32)
    params3 = make_params(kp3, C3, F3)
    ref3 = reference(xyz3, params3)
    out3_f32 = jax.block_until_ready(
        position_encoding_learned(xyz3, params3, tn=256, mxu_bf16=False))
    assert out3_f32.shape == (B3, F3, N3), out3_f32.shape
    assert jnp.allclose(out3_f32, ref3, atol=1e-4, rtol=1e-4)
    out3 = jax.block_until_ready(
        position_encoding_learned(xyz3, params3, tn=256))
    assert jnp.allclose(out3, ref3, atol=2e-2, rtol=2e-2)

    print("KERNEL_OK")
</pallas_src>

<mosaic_0001>
module attributes {stable_mosaic.version = 11 : i64} {
  func.func @_pos_enc_kernel(%arg0: i32, %arg1: i32, %arg2: memref<1x3x128xf32, #tpu.memory_space<vmem>>, %arg3: memref<32x5xf32, #tpu.memory_space<vmem>>, %arg4: memref<32x32xf32, #tpu.memory_space<vmem>>, %arg5: memref<1x32x128xf32, #tpu.memory_space<vmem>>) attributes {dimension_semantics = [#tpu.dimension_semantics<parallel>, #tpu.dimension_semantics<parallel>], iteration_bounds = array<i64: 2, 1>, scalar_prefetch = 0 : i64, scratch_operands = 0 : i64, tpu.core_type = #tpu.core_type<tc>, window_params = [{transform_indices = @transform_0, window_bounds = array<i64: 1, 3, 128>}, {pipeline_mode = #tpu.pipeline_mode<synchronous>, transform_indices = @transform_1, window_bounds = array<i64: 32, 5>}, {pipeline_mode = #tpu.pipeline_mode<synchronous>, transform_indices = @transform_2, window_bounds = array<i64: 32, 32>}, {transform_indices = @transform_3, window_bounds = array<i64: 1, 32, 128>}]} {
    %c0 = arith.constant 0 : index
    %c0_0 = arith.constant 0 : index
    %c0_1 = arith.constant 0 : index
    %0 = vector.load %arg2[%c0, %c0_0, %c0_1] : memref<1x3x128xf32, #tpu.memory_space<vmem>>, vector<1x3x128xf32>
    %1 = vector.shape_cast %0 : vector<1x3x128xf32> to vector<3x128xf32>
    %c0_2 = arith.constant 0 : index
    %c3 = arith.constant 3 : index
    %2 = vector.load %arg3[%c0_2, %c3] : memref<32x5xf32, #tpu.memory_space<vmem>>, vector<32x1xf32>
    %c0_3 = arith.constant 0 : index
    %c4 = arith.constant 4 : index
    %3 = vector.load %arg3[%c0_3, %c4] : memref<32x5xf32, #tpu.memory_space<vmem>>, vector<32x1xf32>
    %c0_4 = arith.constant 0 : index
    %c0_5 = arith.constant 0 : index
    %4 = vector.load %arg3[%c0_4, %c0_5] : memref<32x5xf32, #tpu.memory_space<vmem>>, vector<32x1xf32>
    %5 = vector.extract_strided_slice %1 {offsets = [0, 0], sizes = [1, 128], strides = [1, 1]} : vector<3x128xf32> to vector<1x128xf32>
    %6 = vector.broadcast %4 : vector<32x1xf32> to vector<32x128xf32>
    %7 = vector.broadcast %5 : vector<1x128xf32> to vector<32x128xf32>
    %8 = arith.mulf %6, %7 : vector<32x128xf32>
    %9 = vector.broadcast %2 : vector<32x1xf32> to vector<32x128xf32>
    %10 = arith.addf %9, %8 : vector<32x128xf32>
    %c0_6 = arith.constant 0 : index
    %c1 = arith.constant 1 : index
    %11 = vector.load %arg3[%c0_6, %c1] : memref<32x5xf32, #tpu.memory_space<vmem>>, vector<32x1xf32>
    %12 = vector.extract_strided_slice %1 {offsets = [1, 0], sizes = [1, 128], strides = [1, 1]} : vector<3x128xf32> to vector<1x128xf32>
    %13 = vector.broadcast %11 : vector<32x1xf32> to vector<32x128xf32>
    %14 = vector.broadcast %12 : vector<1x128xf32> to vector<32x128xf32>
    %15 = arith.mulf %13, %14 : vector<32x128xf32>
    %16 = arith.addf %10, %15 : vector<32x128xf32>
    %c0_7 = arith.constant 0 : index
    %c2 = arith.constant 2 : index
    %17 = vector.load %arg3[%c0_7, %c2] : memref<32x5xf32, #tpu.memory_space<vmem>>, vector<32x1xf32>
    %18 = vector.extract_strided_slice %1 {offsets = [2, 0], sizes = [1, 128], strides = [1, 1]} : vector<3x128xf32> to vector<1x128xf32>
    %19 = vector.broadcast %17 : vector<32x1xf32> to vector<32x128xf32>
    %20 = vector.broadcast %18 : vector<1x128xf32> to vector<32x128xf32>
    %21 = arith.mulf %19, %20 : vector<32x128xf32>
    %22 = arith.addf %16, %21 : vector<32x128xf32>
    %cst = arith.constant 0.000000e+00 : f32
    %23 = vector.broadcast %cst : f32 to vector<32x128xf32>
    %24 = arith.maximumf %22, %23 : vector<32x128xf32>
    %c0_8 = arith.constant 0 : index
    %c0_9 = arith.constant 0 : index
    %25 = vector.load %arg4[%c0_8, %c0_9] : memref<32x32xf32, #tpu.memory_space<vmem>>, vector<32x32xf32>
    %cst_10 = arith.constant dense<0.000000e+00> : vector<32x128xf32>
    %26 = tpu.matmul %25, %24, %cst_10 {dimension_numbers = #tpu.dot_dimension_numbers<[1], [0], [0], [1], [0, 0, 1, 1], [], []>, precision = #tpu.contract_precision<fp32>} : vector<32x32xf32>, vector<32x128xf32>, vector<32x128xf32> -> vector<32x128xf32>
    %27 = vector.broadcast %3 : vector<32x1xf32> to vector<32x128xf32>
    %28 = arith.addf %26, %27 : vector<32x128xf32>
    %c0_11 = arith.constant 0 : index
    %c0_12 = arith.constant 0 : index
    %c0_13 = arith.constant 0 : index
    %29 = vector.load %arg5[%c0_11, %c0_12, %c0_13] : memref<1x32x128xf32, #tpu.memory_space<vmem>>, vector<1x32x128xf32>
    %30 = vector.shape_cast %29 : vector<1x32x128xf32> to vector<32x128xf32>
    %31 = vector.shape_cast %28 : vector<32x128xf32> to vector<1x32x128xf32>
    tpu.vector_store %arg5[%c0_11, %c0_12, %c0_13], %31 {strides = array<i32>} : memref<1x32x128xf32, #tpu.memory_space<vmem>>, vector<1x32x128xf32>,
    return
  }
  func.func @transform_0(%arg0: i32, %arg1: i32) -> (i32, i32, i32) {
    %c0_i32 = arith.constant 0 : i32
    %c0_i32_0 = arith.constant 0 : i32
    return %arg0, %c0_i32, %arg1 : i32, i32, i32
  }
  func.func @transform_1(%arg0: i32, %arg1: i32) -> (i32, i32) {
    %c0_i32 = arith.constant 0 : i32
    %c0_i32_0 = arith.constant 0 : i32
    %c0_i32_1 = arith.constant 0 : i32
    return %c0_i32, %c0_i32_0 : i32, i32
  }
  func.func @transform_2(%arg0: i32, %arg1: i32) -> (i32, i32) {
    %c0_i32 = arith.constant 0 : i32
    %c0_i32_0 = arith.constant 0 : i32
    %c0_i32_1 = arith.constant 0 : i32
    return %c0_i32, %c0_i32_0 : i32, i32
  }
  func.func @transform_3(%arg0: i32, %arg1: i32) -> (i32, i32, i32) {
    %c0_i32 = arith.constant 0 : i32
    %c0_i32_0 = arith.constant 0 : i32
    return %arg0, %c0_i32, %arg1 : i32, i32, i32
  }
}

</mosaic_0001>

<llo_original>
// kernel: tpu_custom_call.1
$region0: #{tpu_custom_call.1}
  #allocation0 [shape = 'u32[]', space=smem, size = 0x4, offset = 0x4, fixed_abs, tag = 'smem constant byte address 0x4 - core index']
  #allocation1 [shape = 'u32[144,128]{1,0:T(1,128)}', space=vmem, size = 0x12000, scoped, tag = 'internal scratch']
  %s0 = inlined_call_operand.vmem [shape: f32[2,3,16], index: 0, kind: input, shape index: {}]
  %s1 = inlined_call_operand.vmem [shape: f32[32,5], index: 1, kind: input, shape index: {}]
  %s2 = inlined_call_operand.vmem [shape: f32[32,32], index: 2, kind: input, shape index: {}]
  %s3 = inlined_call_operand.vmem [shape: f32[2,32,16], index: 3, kind: output, shape index: {}]
  %s4 = sld [smem:[#allocation0]]
  $region45: #{tpu_custom_call.1} parent=0
    _
  %s6 = ssub.s32 1, %s4
  %s7 = scalar_select 0, %s6, %s4
  loop: start=0, step=1, limit=4
  $region2: #{tpu_custom_call.1} parent=0 // loop_pre_header
    _
  $region3: #{tpu_custom_call.1} parent=0 // loop_header
    %s9 = sphi 0, %s13
    %p10 = scmp.ge.s32.totalorder %s9, 4
    %s16 = sphi 0, %s28
    %s17 = sphi 0, %s24
    %s18 = sphi 0, %s16
    %s19 = sphi 0, %s17
    %s20 = sphi 0, %s18
    %s21 = sphi 0, %s19
    %s33 = sphi 0, %s35
    %s36 = sphi 0, %s33
    %s37 = sphi 0, %s36
    %s53 = sphi 0, %s37
    %s57 = sphi 0, %s57
    %s59 = sphi 0, %s57
    %s60 = sphi 0, %s59
    %s74 = sphi 0, %s60
    %s78 = sphi 0, %s78
    %s80 = sphi 0, %s78
    %s81 = sphi 0, %s80
    %s95 = sphi 0, %s81
    %s103 = sphi 0, %s105
    %s106 = sphi 0, %s103
    %s107 = sphi 0, %s106
    %s123 = sphi 0, %s107
  $region4: #{tpu_custom_call.1} parent=0 // loop_header_branch
    %12 = sbr.rel (%p10) target = $region8
  $region5: #{tpu_custom_call.1} parent=0 // loop_body
    %s14 = ssub.s32 %s9, 1
    %s15 = ssub.s32 %s9, 2
    %s22 = sadd.s32 1, %s17
    %p23 = scmp.ge.s32.totalorder %s22, 1
    %s24 = scalar_select %p23, 0, %s22
    %s25 = sadd.s32 1, %s16
    %s26 = scalar_select %p23, %s25, %s16
    %p27 = scmp.ge.s32.totalorder %s26, 2
    %s28 = scalar_select %p27, 0, %s26
    %s29 = ssub.s32 %s16, %s28
    %s30 = ssub.s32 %s17, %s24
    %s31 = sor.u32 %s29, %s30
    %p32 = scmp.eq.s32.totalorder %s31, 0
    %s34 = sadd.s32 %s33, 1
    %s35 = scalar_select %p32, %s33, %s34
    %p38 = pneg %p32
    %p39 = scmp.eq.s32.totalorder %s9, 1
    %p40 = por %p38, %p39
    %p41 = scmp.ne.s32.totalorder %s33, %s36
    %p42 = scmp.eq.s32.totalorder %s9, 0
    %p43 = por %p41, %p42
    %p44 = scmp.ne.s32.totalorder %s33, %s36
    %p45 = scmp.eq.s32.totalorder %s14, 1
    %p46 = por %p44, %p45
    %p47 = scmp.ne.s32.totalorder %s36, %s37
    %p48 = scmp.eq.s32.totalorder %s14, 0
    %p49 = por %p47, %p48
    %p50 = scmp.ne.s32.totalorder %s36, %s37
    %p51 = scmp.eq.s32.totalorder %s15, 1
    %p52 = por %p50, %p51
    %p54 = scmp.ne.s32.totalorder %s37, %s53
    %p55 = scmp.eq.s32.totalorder %s15, 0
    %p56 = por %p54, %p55
    %s58 = sadd.s32 %s57, 1
    %p61 = scmp.eq.s32.totalorder %s9, 1
    %p62 = scmp.ne.s32.totalorder %s57, %s59
    %p63 = scmp.eq.s32.totalorder %s9, 0
    %p64 = por %p62, %p63
    %p65 = scmp.ne.s32.totalorder %s57, %s59
    %p66 = scmp.eq.s32.totalorder %s14, 1
    %p67 = por %p65, %p66
    %p68 = scmp.ne.s32.totalorder %s59, %s60
    %p69 = scmp.eq.s32.totalorder %s14, 0
    %p70 = por %p68, %p69
    %p71 = scmp.ne.s32.totalorder %s59, %s60
    %p72 = scmp.eq.s32.totalorder %s15, 1
    %p73 = por %p71, %p72
    %p75 = scmp.ne.s32.totalorder %s60, %s74
    %p76 = scmp.eq.s32.totalorder %s15, 0
    %p77 = por %p75, %p76
    %s79 = sadd.s32 %s78, 1
    %p82 = scmp.eq.s32.totalorder %s9, 1
    %p83 = scmp.ne.s32.totalorder %s78, %s80
    %p84 = scmp.eq.s32.totalorder %s9, 0
    %p85 = por %p83, %p84
    %p86 = scmp.ne.s32.totalorder %s78, %s80
    %p87 = scmp.eq.s32.totalorder %s14, 1
    %p88 = por %p86, %p87
    %p89 = scmp.ne.s32.totalorder %s80, %s81
    %p90 = scmp.eq.s32.totalorder %s14, 0
    %p91 = por %p89, %p90
    %p92 = scmp.ne.s32.totalorder %s80, %s81
    %p93 = scmp.eq.s32.totalorder %s15, 1
    %p94 = por %p92, %p93
    %p96 = scmp.ne.s32.totalorder %s81, %s95
    %p97 = scmp.eq.s32.totalorder %s15, 0
    %p98 = por %p96, %p97
    %s99 = ssub.s32 %s16, %s28
    %s100 = ssub.s32 %s17, %s24
    %s101 = sor.u32 %s99, %s100
    %p102 = scmp.eq.s32.totalorder %s101, 0
    %s104 = sadd.s32 %s103, 1
    %s105 = scalar_select %p102, %s103, %s104
    %p108 = pneg %p102
    %p109 = scmp.eq.s32.totalorder %s9, 1
    %p110 = por %p108, %p109
    %p111 = scmp.ne.s32.totalorder %s103, %s106
    %p112 = scmp.eq.s32.totalorder %s9, 0
    %p113 = por %p111, %p112
    %p114 = scmp.ne.s32.totalorder %s103, %s106
    %p115 = scmp.eq.s32.totalorder %s14, 1
    %p116 = por %p114, %p115
    %p117 = scmp.ne.s32.totalorder %s106, %s107
    %p118 = scmp.eq.s32.totalorder %s14, 0
    %p119 = por %p117, %p118
    %p120 = scmp.ne.s32.totalorder %s106, %s107
    %p121 = scmp.eq.s32.totalorder %s15, 1
    %p122 = por %p120, %p121
    %p124 = scmp.ne.s32.totalorder %s107, %s123
    %p125 = scmp.eq.s32.totalorder %s15, 0
    %p126 = por %p124, %p125
    %p127 = scmp.le.s32.totalorder 1, %s9
    %p128 = scmp.lt.s32.totalorder %s9, 3
    %p129 = pnand %p127, %p128
    %p130 = pneg %p129
    // Predicated region
    $region9: #{tpu_custom_call.1} parent=5 // pred_check
      _
    $region10: #{tpu_custom_call.1} parent=5 // pred_check_branch
      %132 = sbr.rel (%p129) target = $region12
    $region11: #{tpu_custom_call.1} parent=5 // pred_region
      %s133 = ssub.s32 %s9, 1
      // Predicated region
      $region13: #{tpu_custom_call.1} parent=11 // pred_check
        %p134 = pneg %p70
      $region14: #{tpu_custom_call.1} parent=11 // pred_check_branch
        %136 = sbr.rel (%p134) target = $region16
      $region15: #{tpu_custom_call.1} parent=11 // pred_region
        _
      $region16: #{tpu_custom_call.1} parent=11 // pred_fallthru
        _
      // Predicated region
      $region17: #{tpu_custom_call.1} parent=11 // pred_check
        %p137 = pneg %p91
      $region18: #{tpu_custom_call.1} parent=11 // pred_check_branch
        %139 = sbr.rel (%p137) target = $region20
      $region19: #{tpu_custom_call.1} parent=11 // pred_region
        _
      $region20: #{tpu_custom_call.1} parent=11 // pred_fallthru
        _
    $region12: #{tpu_custom_call.1} parent=5 // pred_fallthru
      _
    %p140 = scmp.lt.s32.totalorder %s9, 2
    // Predicated region
    $region21: #{tpu_custom_call.1} parent=5 // pred_check
      %p141 = pneg %p140
    $region22: #{tpu_custom_call.1} parent=5 // pred_check_branch
      %143 = sbr.rel (%p141) target = $region24
    $region23: #{tpu_custom_call.1} parent=5 // pred_region
      // Predicated region
      $region25: #{tpu_custom_call.1} parent=23 // pred_check
        %p144 = pneg %p43
      $region26: #{tpu_custom_call.1} parent=23 // pred_check_branch
        %146 = sbr.rel (%p144) target = $region28
      $region27: #{tpu_custom_call.1} parent=23 // pred_region
        %p147 = scmp.lt.s32.totalorder %s16, 1
        %s148 = scalar_select %p147, %s16, 1
        %p149 = scmp.lt.s32.totalorder %s17, 0
        %s150 = scalar_select %p149, %s17, 0
        %s151 = sadd.s32 %s150, %s148
        %s152 = smul.addr %s151, 4
        %s153 = scalar_lea.vmem %s0, %s152
      $region28: #{tpu_custom_call.1} parent=23 // pred_fallthru
        _
    $region24: #{tpu_custom_call.1} parent=5 // pred_fallthru
      _
    %p154 = scmp.le.s32.totalorder 1, %s9
    %p155 = scmp.lt.s32.totalorder %s9, 3
    %p156 = pnand %p154, %p155
    %p157 = pneg %p156
    // Predicated region
    $region29: #{tpu_custom_call.1} parent=5 // pred_check
      _
    $region30: #{tpu_custom_call.1} parent=5 // pred_check_branch
      %159 = sbr.rel (%p156) target = $region32
    $region31: #{tpu_custom_call.1} parent=5 // pred_region
      %s160 = ssub.s32 %s9, 1
      %p161 = scmp.lt.s32.totalorder %s18, 1
      %s162 = scalar_select %p161, %s18, 1
      %p163 = scmp.lt.s32.totalorder %s19, 0
      %s164 = scalar_select %p163, %s19, 0
      %s165 = sadd.s32 %s164, %s162
      %s166 = smul.addr %s165, 4
      %s167 = scalar_lea.vmem %s0, %s166
      %p168 = pneg %p49
      %p169 = pneg %p46
      %p170 = pneg %p70
      %p171 = pneg %p67
      %p172 = pneg %p91
      %p173 = pneg %p88
      %p174 = pneg %p119
      %p175 = pneg %p116
      %p176 = scmp.lt.s32.totalorder %s18, 1
      %s177 = scalar_select %p176, %s18, 1
      %p178 = scmp.lt.s32.totalorder %s19, 0
      %s179 = scalar_select %p178, %s19, 0
      %s180 = smul.addr %s177, 4
      %s181 = sadd.s32 %s179, %s180
      %s182 = smul.addr %s181, 8
      %s183 = scalar_lea.vmem %s3, %s182
      %p184 = scmp.lt.s32.totalorder %s18, 1
      %s185 = scalar_select %p184, %s18, 1
      %p186 = scmp.lt.s32.totalorder %s19, 0
      %s187 = scalar_select %p186, %s19, 0
      %s188 = sadd.s32 %s187, %s185
      %s189 = smul.addr %s188, 4
      %s190 = scalar_lea.vmem %s0, %s189
      %p191 = scmp.lt.s32.totalorder %s18, 1
      %s192 = scalar_select %p191, %s18, 1
      %p193 = scmp.lt.s32.totalorder %s19, 0
      %s194 = scalar_select %p193, %s19, 0
      %s195 = smul.addr %s192, 4
      %s196 = sadd.s32 %s194, %s195
      %s197 = smul.addr %s196, 8
      %s198 = scalar_lea.vmem %s3, %s197
      %v199 = vld [vmem:[%s190] sm:$0x7]
      %v200 = vld [vmem:[%s1] sm:$0xff]
      %v201 = vld [vmem:[%s1 + $0x8] sm:$0xff]
      %v202 = vld [vmem:[%s1 + $0x10] sm:$0xff]
      %v203 = vld [vmem:[%s1 + $0x18] sm:$0xff]
      %205 = vset.pattern.permute.xlu0 0
      %206 = vperm.xlu0 %205, %v200
      %v207 = vpop.permute.xlu0 %206
      %210 = vset.pattern.permute.xlu0 0
      %211 = vperm.xlu0 %210, %v201
      %v212 = vpop.permute.xlu0 %211
      %215 = vset.pattern.permute.xlu0 0
      %216 = vperm.xlu0 %215, %v202
      %v217 = vpop.permute.xlu0 %216
      %220 = vset.pattern.permute.xlu0 0
      %221 = vperm.xlu0 %220, %v203
      %v222 = vpop.permute.xlu0 %221
      %v224 = vlaneseq
      %v225 = vshrl.u32 %v224, 7
      %v226 = vsub.s32 0, %v225
      %v227 = vrot.slane %v199, %v226
      %v228 = vmul.f32 %v207, %v227
      %v229 = vmul.f32 %v212, %v227
      %v230 = vmul.f32 %v217, %v227
      %v231 = vmul.f32 %v222, %v227
      %232 = vset.pattern.permute.xlu0 3
      %233 = vperm.xlu0 %232, %v200
      %v234 = vpop.permute.xlu0 %233
      %236 = vset.pattern.permute.xlu0 3
      %237 = vperm.xlu0 %236, %v201
      %v238 = vpop.permute.xlu0 %237
      %240 = vset.pattern.permute.xlu0 3
      %241 = vperm.xlu0 %240, %v202
      %v242 = vpop.permute.xlu0 %241
      %244 = vset.pattern.permute.xlu0 3
      %245 = vperm.xlu0 %244, %v203
      %v246 = vpop.permute.xlu0 %245
      %v248 = vadd.f32 %v234, %v228
      %v249 = vadd.f32 %v238, %v229
      %v250 = vadd.f32 %v242, %v230
      %v251 = vadd.f32 %v246, %v231
      %252 = vset.pattern.permute.xlu0 1
      %253 = vperm.xlu0 %252, %v200
      %v254 = vpop.permute.xlu0 %253
      %256 = vset.pattern.permute.xlu0 1
      %257 = vperm.xlu0 %256, %v201
      %v258 = vpop.permute.xlu0 %257
      %260 = vset.pattern.permute.xlu0 1
      %261 = vperm.xlu0 %260, %v202
      %v262 = vpop.permute.xlu0 %261
      %264 = vset.pattern.permute.xlu0 1
      %265 = vperm.xlu0 %264, %v203
      %v266 = vpop.permute.xlu0 %265
      %v268 = vlaneseq
      %v269 = vshrl.u32 %v268, 7
      %v270 = vsub.s32 1, %v269
      %v271 = vrot.slane %v199, %v270
      %v272 = vmul.f32 %v254, %v271
      %v273 = vmul.f32 %v258, %v271
      %v274 = vmul.f32 %v262, %v271
      %v275 = vmul.f32 %v266, %v271
      %v276 = vadd.f32 %v248, %v272
      %v277 = vadd.f32 %v249, %v273
      %v278 = vadd.f32 %v250, %v274
      %v279 = vadd.f32 %v251, %v275
      %280 = vset.pattern.permute.xlu0 2
      %281 = vperm.xlu0 %280, %v200
      %v282 = vpop.permute.xlu0 %281
      %284 = vset.pattern.permute.xlu0 2
      %285 = vperm.xlu0 %284, %v201
      %v286 = vpop.permute.xlu0 %285
      %288 = vset.pattern.permute.xlu0 2
      %289 = vperm.xlu0 %288, %v202
      %v290 = vpop.permute.xlu0 %289
      %292 = vset.pattern.permute.xlu0 2
      %293 = vperm.xlu0 %292, %v203
      %v294 = vpop.permute.xlu0 %293
      %v296 = vlaneseq
      %v297 = vshrl.u32 %v296, 7
      %v298 = vsub.s32 2, %v297
      %v299 = vrot.slane %v199, %v298
      %v300 = vmul.f32 %v282, %v299
      %v301 = vmul.f32 %v286, %v299
      %v302 = vmul.f32 %v290, %v299
      %v303 = vmul.f32 %v294, %v299
      %v304 = vadd.f32 %v276, %v300
      %v305 = vadd.f32 %v277, %v301
      %v306 = vadd.f32 %v278, %v302
      %v307 = vadd.f32 %v279, %v303
      %v308 = vmax.f32 %v304, 0.0
      %v309 = vmax.f32 %v305, 0.0
      %v310 = vmax.f32 %v306, 0.0
      %v311 = vmax.f32 %v307, 0.0
      %v312 = vld [vmem:[%s2] sm:$0xff]
      %v313 = vld [vmem:[%s2 + $0x8] sm:$0xff]
      %v314 = vld [vmem:[%s2 + $0x10] sm:$0xff]
      %v315 = vld [vmem:[%s2 + $0x18] sm:$0xff]
      %316 = vset.pattern.permute.xlu0 4
      %317 = vperm.xlu0 %316, %v200
      %v318 = vpop.permute.xlu0 %317
      %320 = vset.pattern.permute.xlu0 4
      %321 = vperm.xlu0 %320, %v201
      %v322 = vpop.permute.xlu0 %321
      %324 = vset.pattern.permute.xlu0 4
      %325 = vperm.xlu0 %324, %v202
      %v326 = vpop.permute.xlu0 %325
      %328 = vset.pattern.permute.xlu0 4
      %329 = vperm.xlu0 %328, %v203
      %v330 = vpop.permute.xlu0 %329
      %vm332 = vcmask 261120
      %v334 = vsel %vm332, %v312, 0
      %v337 = vsel %vm332, %v313, 0
      %v340 = vsel %vm332, %v314, 0
      %v343 = vsel %vm332, %v315, 0
      %345 = vmatprep.subr.mxu0 0.0
      %346 = vmatpush1.msra.mxu0 0.0
      %347 = vmatprep.subr.mxu0 0.0
      %348 = vmatpush1.msra.mxu0 0.0
      %349 = vmatprep.subr.mxu0 0.0
      %350 = vmatpush1.msra.mxu0 0.0
      %351 = vmatprep.subr.mxu0 0.0
      %352 = vmatpush1.msra.mxu0 0.0
      %353 = vmatprep.subr.mxu0 0.0
      %354 = vmatpush1.msra.mxu0 0.0
      %355 = vmatprep.subr.mxu0 0.0
      %356 = vmatpush1.msra.mxu0 0.0
      %357 = vmatprep.subr.mxu0 0.0
      %358 = vmatpush1.msra.mxu0 0.0
      %359 = vmatprep.subr.mxu0 0.0
      %360 = vmatpush1.msra.mxu0 0.0
      %361 = vmatprep.subr.mxu0 0.0
      %362 = vmatpush1.msra.mxu0 0.0
      %363 = vmatprep.subr.mxu0 0.0
      %364 = vmatpush1.msra.mxu0 0.0
      %365 = vmatprep.subr.mxu0 0.0
      %366 = vmatpush1.msra.mxu0 0.0
      %367 = vmatprep.subr.mxu0 0.0
      %368 = vmatpush1.msra.mxu0 0.0
      %369 = vmatprep.subr.mxu0 0.0
      %v370 = vand.u32 %v311, 4294901760
      %371 = vmatpush1.msra.mxu0 %v370
      %372 = vmatprep.subr.mxu0 0.0
      %v373 = vand.u32 %v310, 4294901760
      %374 = vmatpush1.msra.mxu0 %v373
      %375 = vmatprep.subr.mxu0 0.0
      %v376 = vand.u32 %v309, 4294901760
      %377 = vmatpush1.msra.mxu0 %v376
      %378 = vmatprep.subr.mxu0 0.0
      %v379 = vand.u32 %v308, 4294901760
      %380 = vmatpush1.msra.mxu0 %v379
      %381 = vmatprep.subr.mxu0 0.0
      %382 = vmatpush2.msra.mxu0 0.0
      %383 = vmatprep.subr.mxu0 0.0
      %384 = vmatpush2.msra.mxu0 0.0
      %385 = vmatprep.subr.mxu0 0.0
      %386 = vmatpush2.msra.mxu0 0.0
      %387 = vmatprep.subr.mxu0 0.0
      %388 = vmatpush2.msra.mxu0 0.0
      %389 = vmatprep.subr.mxu0 0.0
      %390 = vmatpush2.msra.mxu0 0.0
      %391 = vmatprep.subr.mxu0 0.0
      %392 = vmatpush2.msra.mxu0 0.0
      %393 = vmatprep.subr.mxu0 0.0
      %394 = vmatpush2.msra.mxu0 0.0
      %395 = vmatprep.subr.mxu0 0.0
      %396 = vmatpush2.msra.mxu0 0.0
      %397 = vmatprep.subr.mxu0 0.0
      %398 = vmatpush2.msra.mxu0 0.0
      %399 = vmatprep.subr.mxu0 0.0
      %400 = vmatpush2.msra.mxu0 0.0
      %401 = vmatprep.subr.mxu0 0.0
      %402 = vmatpush2.msra.mxu0 0.0
      %403 = vmatprep.subr.mxu0 0.0
      %404 = vmatpush2.msra.mxu0 0.0
      %405 = vmatprep.subr.mxu0 0.0
      %406 = vmatpush2.msra.mxu0 0.0
      %407 = vmatprep.subr.mxu0 0.0
      %408 = vmatpush2.msra.mxu0 0.0
      %409 = vmatprep.subr.mxu0 0.0
      %410 = vmatpush2.msra.mxu0 0.0
      %411 = vmatprep.subr.mxu0 0.0
      %412 = vmatpush2.msra.mxu0 0.0
      %413 = vmatprep.mubr.f32.mxu0 0.0
      %v414 = vand.u32 %v334, 4294901760
      %v415 = vsub.f32 %v334, %v414
      %v416 = vand.u32 %v415, 4294901760
      %v417 = vsub.f32 %v415, %v416
      %v418 = vand.u32 %v417, 4294901760
      %419 = vmatmul.mubr.f32.gmra.mxu0 %v418
      %v420 = vpop.f32.mrf.mxu0
      %v421 = vadd.f32 %v318, %v420
      %v422 = vpop.f32.mrf.mxu0
      %423 = vmatprep.mubr.f32.mxu0 0.0
      %v424 = vand.u32 %v337, 4294901760
      %v425 = vsub.f32 %v337, %v424
      %v426 = vand.u32 %v425, 4294901760
      %v427 = vsub.f32 %v425, %v426
      %v428 = vand.u32 %v427, 4294901760
      %429 = vmatmul.mubr.f32.gmra.mxu0 %v428
      %v430 = vpop.f32.mrf.mxu0
      %v431 = vadd.f32 %v322, %v430
      %v432 = vpop.f32.mrf.mxu0
      %433 = vmatprep.mubr.f32.mxu0 0.0
      %v434 = vand.u32 %v340, 4294901760
      %v435 = vsub.f32 %v340, %v434
      %v436 = vand.u32 %v435, 4294901760
      %v437 = vsub.f32 %v435, %v436
      %v438 = vand.u32 %v437, 4294901760
      %439 = vmatmul.mubr.f32.gmra.mxu0 %v438
      %v440 = vpop.f32.mrf.mxu0
      %v441 = vadd.f32 %v326, %v440
      %v442 = vpop.f32.mrf.mxu0
      %443 = vmatprep.mubr.f32.mxu0 0.0
      %v444 = vand.u32 %v343, 4294901760
      %v445 = vsub.f32 %v343, %v444
      %v446 = vand.u32 %v445, 4294901760
      %v447 = vsub.f32 %v445, %v446
      %v448 = vand.u32 %v447, 4294901760
      %449 = vmatmul.mubr.f32.gmra.mxu0 %v448
      %v450 = vpop.f32.mrf.mxu0
      %v451 = vadd.f32 %v330, %v450
      %v452 = vpop.f32.mrf.mxu0
      %453 = vdwg.mxu0
      %454 = vmatprep.subr.mxu0 0.0
      %455 = vmatpush1.msra.mxu0 0.0
      %456 = vmatprep.subr.mxu0 0.0
      %457 = vmatpush1.msra.mxu0 0.0
      %458 = vmatprep.subr.mxu0 0.0
      %459 = vmatpush1.msra.mxu0 0.0
      %460 = vmatprep.subr.mxu0 0.0
      %461 = vmatpush1.msra.mxu0 0.0
      %462 = vmatprep.subr.mxu0 0.0
      %463 = vmatpush1.msra.mxu0 0.0
      %464 = vmatprep.subr.mxu0 0.0
      %465 = vmatpush1.msra.mxu0 0.0
      %466 = vmatprep.subr.mxu0 0.0
      %467 = vmatpush1.msra.mxu0 0.0
      %468 = vmatprep.subr.mxu0 0.0
      %469 = vmatpush1.msra.mxu0 0.0
      %470 = vmatprep.subr.mxu0 0.0
      %471 = vmatpush1.msra.mxu0 0.0
      %472 = vmatprep.subr.mxu0 0.0
      %473 = vmatpush1.msra.mxu0 0.0
      %474 = vmatprep.subr.mxu0 0.0
      %475 = vmatpush1.msra.mxu0 0.0
      %476 = vmatprep.subr.mxu0 0.0
      %477 = vmatpush1.msra.mxu0 0.0
      %478 = vmatprep.subr.mxu0 0.0
      %v479 = vand.u32 %v311, 4294901760
      %v480 = vsub.f32 %v311, %v479
      %v481 = vand.u32 %v480, 4294901760
      %v482 = vsub.f32 %v480, %v481
      %v483 = vand.u32 %v482, 4294901760
      %484 = vmatpush1.msra.mxu0 %v483
      %485 = vmatprep.subr.mxu0 0.0
      %v486 = vand.u32 %v310, 4294901760
      %v487 = vsub.f32 %v310, %v486
      %v488 = vand.u32 %v487, 4294901760
      %v489 = vsub.f32 %v487, %v488
      %v490 = vand.u32 %v489, 4294901760
      %491 = vmatpush1.msra.mxu0 %v490
      %492 = vmatprep.subr.mxu0 0.0
      %v493 = vand.u32 %v309, 4294901760
      %v494 = vsub.f32 %v309, %v493
      %v495 = vand.u32 %v494, 4294901760
      %v496 = vsub.f32 %v494, %v495
      %v497 = vand.u32 %v496, 4294901760
      %498 = vmatpush1.msra.mxu0 %v497
      %499 = vmatprep.subr.mxu0 0.0
      %v500 = vand.u32 %v308, 4294901760
      %v501 = vsub.f32 %v308, %v500
      %v502 = vand.u32 %v501, 4294901760
      %v503 = vsub.f32 %v501, %v502
      %v504 = vand.u32 %v503, 4294901760
      %505 = vmatpush1.msra.mxu0 %v504
      %506 = vmatprep.subr.mxu0 0.0
      %507 = vmatpush2.msra.mxu0 0.0
      %508 = vmatprep.subr.mxu0 0.0
      %509 = vmatpush2.msra.mxu0 0.0
      %510 = vmatprep.subr.mxu0 0.0
      %511 = vmatpush2.msra.mxu0 0.0
      %512 = vmatprep.subr.mxu0 0.0
      %513 = vmatpush2.msra.mxu0 0.0
      %514 = vmatprep.subr.mxu0 0.0
      %515 = vmatpush2.msra.mxu0 0.0
      %516 = vmatprep.subr.mxu0 0.0
      %517 = vmatpush2.msra.mxu0 0.0
      %518 = vmatprep.subr.mxu0 0.0
      %519 = vmatpush2.msra.mxu0 0.0
      %520 = vmatprep.subr.mxu0 0.0
      %521 = vmatpush2.msra.mxu0 0.0
      %522 = vmatprep.subr.mxu0 0.0
      %523 = vmatpush2.msra.mxu0 0.0
      %524 = vmatprep.subr.mxu0 0.0
      %525 = vmatpush2.msra.mxu0 0.0
      %526 = vmatprep.subr.mxu0 0.0
      %527 = vmatpush2.msra.mxu0 0.0
      %528 = vmatprep.subr.mxu0 0.0
      %529 = vmatpush2.msra.mxu0 0.0
      %530 = vmatprep.subr.mxu0 0.0
      %531 = vmatpush2.msra.mxu0 0.0
      %532 = vmatprep.subr.mxu0 0.0
      %533 = vmatpush2.msra.mxu0 0.0
      %534 = vmatprep.subr.mxu0 0.0
      %535 = vmatpush2.msra.mxu0 0.0
      %536 = vmatprep.subr.mxu0 0.0
      %537 = vmatpush2.msra.mxu0 0.0
      %538 = vmatprep.mubr.f32.mxu0 0.0
      %v539 = vand.u32 %v334, 4294901760
      %540 = vmatmul.mubr.f32.gmra.mxu0 %v539
      %v541 = vpop.f32.mrf.mxu0
      %v542 = vadd.f32 %v421, %v541
      %v543 = vpop.f32.mrf.mxu0
      %544 = vmatprep.mubr.f32.mxu0 0.0
      %v545 = vand.u32 %v337, 4294901760
      %546 = vmatmul.mubr.f32.gmra.mxu0 %v545
      %v547 = vpop.f32.mrf.mxu0
      %v548 = vadd.f32 %v431, %v547
      %v549 = vpop.f32.mrf.mxu0
      %550 = vmatprep.mubr.f32.mxu0 0.0
      %v551 = vand.u32 %v340, 4294901760
      %552 = vmatmul.mubr.f32.gmra.mxu0 %v551
      %v553 = vpop.f32.mrf.mxu0
      %v554 = vadd.f32 %v441, %v553
      %v555 = vpop.f32.mrf.mxu0
      %556 = vmatprep.mubr.f32.mxu0 0.0
      %v557 = vand.u32 %v343, 4294901760
      %558 = vmatmul.mubr.f32.gmra.mxu0 %v557
      %v559 = vpop.f32.mrf.mxu0
      %v560 = vadd.f32 %v451, %v559
      %v561 = vpop.f32.mrf.mxu0
      %562 = vdwg.mxu0
      %563 = vmatprep.subr.mxu0 0.0
      %564 = vmatpush1.msra.mxu0 0.0
      %565 = vmatprep.subr.mxu0 0.0
      %566 = vmatpush1.msra.mxu0 0.0
      %567 = vmatprep.subr.mxu0 0.0
      %568 = vmatpush1.msra.mxu0 0.0
      %569 = vmatprep.subr.mxu0 0.0
      %570 = vmatpush1.msra.mxu0 0.0
      %571 = vmatprep.subr.mxu0 0.0
      %572 = vmatpush1.msra.mxu0 0.0
      %573 = vmatprep.subr.mxu0 0.0
      %574 = vmatpush1.msra.mxu0 0.0
      %575 = vmatprep.subr.mxu0 0.0
      %576 = vmatpush1.msra.mxu0 0.0
      %577 = vmatprep.subr.mxu0 0.0
      %578 = vmatpush1.msra.mxu0 0.0
      %579 = vmatprep.subr.mxu0 0.0
      %580 = vmatpush1.msra.mxu0 0.0
      %581 = vmatprep.subr.mxu0 0.0
      %582 = vmatpush1.msra.mxu0 0.0
      %583 = vmatprep.subr.mxu0 0.0
      %584 = vmatpush1.msra.mxu0 0.0
      %585 = vmatprep.subr.mxu0 0.0
      %586 = vmatpush1.msra.mxu0 0.0
      %587 = vmatprep.subr.mxu0 0.0
      %v588 = vand.u32 %v311, 4294901760
      %v589 = vsub.f32 %v311, %v588
      %590 = vmatpush1.msra.mxu0 %v589
      %591 = vmatprep.subr.mxu0 0.0
      %v592 = vand.u32 %v310, 4294901760
      %v593 = vsub.f32 %v310, %v592
      %594 = vmatpush1.msra.mxu0 %v593
      %595 = vmatprep.subr.mxu0 0.0
      %v596 = vand.u32 %v309, 4294901760
      %v597 = vsub.f32 %v309, %v596
      %598 = vmatpush1.msra.mxu0 %v597
      %599 = vmatprep.subr.mxu0 0.0
      %v600 = vand.u32 %v308, 4294901760
      %v601 = vsub.f32 %v308, %v600
      %602 = vmatpush1.msra.mxu0 %v601
      %603 = vmatprep.subr.mxu0 0.0
      %604 = vmatpush2.msra.mxu0 0.0
      %605 = vmatprep.subr.mxu0 0.0
      %606 = vmatpush2.msra.mxu0 0.0
      %607 = vmatprep.subr.mxu0 0.0
      %608 = vmatpush2.msra.mxu0 0.0
      %609 = vmatprep.subr.mxu0 0.0
      %610 = vmatpush2.msra.mxu0 0.0
      %611 = vmatprep.subr.mxu0 0.0
      %612 = vmatpush2.msra.mxu0 0.0
      %613 = vmatprep.subr.mxu0 0.0
      %614 = vmatpush2.msra.mxu0 0.0
      %615 = vmatprep.subr.mxu0 0.0
      %616 = vmatpush2.msra.mxu0 0.0
      %617 = vmatprep.subr.mxu0 0.0
      %618 = vmatpush2.msra.mxu0 0.0
      %619 = vmatprep.subr.mxu0 0.0
      %620 = vmatpush2.msra.mxu0 0.0
      %621 = vmatprep.subr.mxu0 0.0
      %622 = vmatpush2.msra.mxu0 0.0
      %623 = vmatprep.subr.mxu0 0.0
      %624 = vmatpush2.msra.mxu0 0.0
      %625 = vmatprep.subr.mxu0 0.0
      %626 = vmatpush2.msra.mxu0 0.0
      %627 = vmatprep.subr.mxu0 0.0
      %628 = vmatpush2.msra.mxu0 0.0
      %629 = vmatprep.subr.mxu0 0.0
      %630 = vmatpush2.msra.mxu0 0.0
      %631 = vmatprep.subr.mxu0 0.0
      %632 = vmatpush2.msra.mxu0 0.0
      %633 = vmatprep.subr.mxu0 0.0
      %634 = vmatpush2.msra.mxu0 0.0
      %635 = vmatprep.mubr.f32.mxu0 0.0
      %v636 = vand.u32 %v334, 4294901760
      %v637 = vsub.f32 %v334, %v636
      %638 = vmatmul.mubr.f32.gmra.mxu0 %v637
      %v639 = vpop.f32.mrf.mxu0
      %v640 = vadd.f32 %v542, %v639
      %v641 = vpop.f32.mrf.mxu0
      %642 = vmatprep.mubr.f32.mxu0 0.0
      %v643 = vand.u32 %v337, 4294901760
      %v644 = vsub.f32 %v337, %v643
      %645 = vmatmul.mubr.f32.gmra.mxu0 %v644
      %v646 = vpop.f32.mrf.mxu0
      %v647 = vadd.f32 %v548, %v646
      %v648 = vpop.f32.mrf.mxu0
      %649 = vmatprep.mubr.f32.mxu0 0.0
      %v650 = vand.u32 %v340, 4294901760
      %v651 = vsub.f32 %v340, %v650
      %652 = vmatmul.mubr.f32.gmra.mxu0 %v651
      %v653 = vpop.f32.mrf.mxu0
      %v654 = vadd.f32 %v554, %v653
      %v655 = vpop.f32.mrf.mxu0
      %656 = vmatprep.mubr.f32.mxu0 0.0
      %v657 = vand.u32 %v343, 4294901760
      %v658 = vsub.f32 %v343, %v657
      %659 = vmatmul.mubr.f32.gmra.mxu0 %v658
      %v660 = vpop.f32.mrf.mxu0
      %v661 = vadd.f32 %v560, %v660
      %v662 = vpop.f32.mrf.mxu0
      %663 = vdwg.mxu0
      %664 = vmatprep.subr.mxu0 0.0
      %665 = vmatpush1.msra.mxu0 0.0
      %666 = vmatprep.subr.mxu0 0.0
      %667 = vmatpush1.msra.mxu0 0.0
      %668 = vmatprep.subr.mxu0 0.0
      %669 = vmatpush1.msra.mxu0 0.0
      %670 = vmatprep.subr.mxu0 0.0
      %671 = vmatpush1.msra.mxu0 0.0
      %672 = vmatprep.subr.mxu0 0.0
      %673 = vmatpush1.msra.mxu0 0.0
      %674 = vmatprep.subr.mxu0 0.0
      %675 = vmatpush1.msra.mxu0 0.0
      %676 = vmatprep.subr.mxu0 0.0
      %677 = vmatpush1.msra.mxu0 0.0
      %678 = vmatprep.subr.mxu0 0.0
      %679 = vmatpush1.msra.mxu0 0.0
      %680 = vmatprep.subr.mxu0 0.0
      %681 = vmatpush1.msra.mxu0 0.0
      %682 = vmatprep.subr.mxu0 0.0
      %683 = vmatpush1.msra.mxu0 0.0
      %684 = vmatprep.subr.mxu0 0.0
      %685 = vmatpush1.msra.mxu0 0.0
      %686 = vmatprep.subr.mxu0 0.0
      %687 = vmatpush1.msra.mxu0 0.0
      %688 = vmatprep.subr.mxu0 0.0
      %v689 = vand.u32 %v311, 4294901760
      %690 = vmatpush1.msra.mxu0 %v689
      %691 = vmatprep.subr.mxu0 0.0
      %v692 = vand.u32 %v310, 4294901760
      %693 = vmatpush1.msra.mxu0 %v692
      %694 = vmatprep.subr.mxu0 0.0
      %v695 = vand.u32 %v309, 4294901760
      %696 = vmatpush1.msra.mxu0 %v695
      %697 = vmatprep.subr.mxu0 0.0
      %v698 = vand.u32 %v308, 4294901760
      %699 = vmatpush1.msra.mxu0 %v698
      %700 = vmatprep.subr.mxu0 0.0
      %701 = vmatpush2.msra.mxu0 0.0
      %702 = vmatprep.subr.mxu0 0.0
      %703 = vmatpush2.msra.mxu0 0.0
      %704 = vmatprep.subr.mxu0 0.0
      %705 = vmatpush2.msra.mxu0 0.0
      %706 = vmatprep.subr.mxu0 0.0
      %707 = vmatpush2.msra.mxu0 0.0
      %708 = vmatprep.subr.mxu0 0.0
      %709 = vmatpush2.msra.mxu0 0.0
      %710 = vmatprep.subr.mxu0 0.0
      %711 = vmatpush2.msra.mxu0 0.0
      %712 = vmatprep.subr.mxu0 0.0
      %713 = vmatpush2.msra.mxu0 0.0
      %714 = vmatprep.subr.mxu0 0.0
      %715 = vmatpush2.msra.mxu0 0.0
      %716 = vmatprep.subr.mxu0 0.0
      %717 = vmatpush2.msra.mxu0 0.0
      %718 = vmatprep.subr.mxu0 0.0
      %719 = vmatpush2.msra.mxu0 0.0
      %720 = vmatprep.subr.mxu0 0.0
      %721 = vmatpush2.msra.mxu0 0.0
      %722 = vmatprep.subr.mxu0 0.0
      %723 = vmatpush2.msra.mxu0 0.0
      %724 = vmatprep.subr.mxu0 0.0
      %725 = vmatpush2.msra.mxu0 0.0
      %726 = vmatprep.subr.mxu0 0.0
      %727 = vmatpush2.msra.mxu0 0.0
      %728 = vmatprep.subr.mxu0 0.0
      %729 = vmatpush2.msra.mxu0 0.0
      %730 = vmatprep.subr.mxu0 0.0
      %731 = vmatpush2.msra.mxu0 0.0
      %732 = vmatprep.mubr.f32.mxu0 0.0
      %v733 = vand.u32 %v334, 4294901760
      %v734 = vsub.f32 %v334, %v733
      %v735 = vand.u32 %v734, 4294901760
      %736 = vmatmul.mubr.f32.gmra.mxu0 %v735
      %v737 = vpop.f32.mrf.mxu0
      %v738 = vadd.f32 %v640, %v737
      %v739 = vpop.f32.mrf.mxu0
      %740 = vmatprep.mubr.f32.mxu0 0.0
      %v741 = vand.u32 %v337, 4294901760
      %v742 = vsub.f32 %v337, %v741
      %v743 = vand.u32 %v742, 4294901760
      %744 = vmatmul.mubr.f32.gmra.mxu0 %v743
      %v745 = vpop.f32.mrf.mxu0
      %v746 = vadd.f32 %v647, %v745
      %v747 = vpop.f32.mrf.mxu0
      %748 = vmatprep.mubr.f32.mxu0 0.0
      %v749 = vand.u32 %v340, 4294901760
      %v750 = vsub.f32 %v340, %v749
      %v751 = vand.u32 %v750, 4294901760
      %752 = vmatmul.mubr.f32.gmra.mxu0 %v751
      %v753 = vpop.f32.mrf.mxu0
      %v754 = vadd.f32 %v654, %v753
      %v755 = vpop.f32.mrf.mxu0
      %756 = vmatprep.mubr.f32.mxu0 0.0
      %v757 = vand.u32 %v343, 4294901760
      %v758 = vsub.f32 %v343, %v757
      %v759 = vand.u32 %v758, 4294901760
      %760 = vmatmul.mubr.f32.gmra.mxu0 %v759
      %v761 = vpop.f32.mrf.mxu0
      %v762 = vadd.f32 %v661, %v761
      %v763 = vpop.f32.mrf.mxu0
      %764 = vdwg.mxu0
      %765 = vmatprep.subr.mxu0 0.0
      %766 = vmatpush1.msra.mxu0 0.0
      %767 = vmatprep.subr.mxu0 0.0
      %768 = vmatpush1.msra.mxu0 0.0
      %769 = vmatprep.subr.mxu0 0.0
      %770 = vmatpush1.msra.mxu0 0.0
      %771 = vmatprep.subr.mxu0 0.0
      %772 = vmatpush1.msra.mxu0 0.0
      %773 = vmatprep.subr.mxu0 0.0
      %774 = vmatpush1.msra.mxu0 0.0
      %775 = vmatprep.subr.mxu0 0.0
      %776 = vmatpush1.msra.mxu0 0.0
      %777 = vmatprep.subr.mxu0 0.0
      %778 = vmatpush1.msra.mxu0 0.0
      %779 = vmatprep.subr.mxu0 0.0
      %780 = vmatpush1.msra.mxu0 0.0
      %781 = vmatprep.subr.mxu0 0.0
      %782 = vmatpush1.msra.mxu0 0.0
      %783 = vmatprep.subr.mxu0 0.0
      %784 = vmatpush1.msra.mxu0 0.0
      %785 = vmatprep.subr.mxu0 0.0
      %786 = vmatpush1.msra.mxu0 0.0
      %787 = vmatprep.subr.mxu0 0.0
      %788 = vmatpush1.msra.mxu0 0.0
      %789 = vmatprep.subr.mxu0 0.0
      %v790 = vand.u32 %v311, 4294901760
      %v791 = vsub.f32 %v311, %v790
      %v792 = vand.u32 %v791, 4294901760
      %793 = vmatpush1.msra.mxu0 %v792
      %794 = vmatprep.subr.mxu0 0.0
      %v795 = vand.u32 %v310, 4294901760
      %v796 = vsub.f32 %v310, %v795
      %v797 = vand.u32 %v796, 4294901760
      %798 = vmatpush1.msra.mxu0 %v797
      %799 = vmatprep.subr.mxu0 0.0
      %v800 = vand.u32 %v309, 4294901760
      %v801 = vsub.f32 %v309, %v800
      %v802 = vand.u32 %v801, 4294901760
      %803 = vmatpush1.msra.mxu0 %v802
      %804 = vmatprep.subr.mxu0 0.0
      %v805 = vand.u32 %v308, 4294901760
      %v806 = vsub.f32 %v308, %v805
      %v807 = vand.u32 %v806, 4294901760
      %808 = vmatpush1.msra.mxu0 %v807
      %809 = vmatprep.subr.mxu0 0.0
      %810 = vmatpush2.msra.mxu0 0.0
      %811 = vmatprep.subr.mxu0 0.0
      %812 = vmatpush2.msra.mxu0 0.0
      %813 = vmatprep.subr.mxu0 0.0
      %814 = vmatpush2.msra.mxu0 0.0
      %815 = vmatprep.subr.mxu0 0.0
      %816 = vmatpush2.msra.mxu0 0.0
      %817 = vmatprep.subr.mxu0 0.0
      %818 = vmatpush2.msra.mxu0 0.0
      %819 = vmatprep.subr.mxu0 0.0
      %820 = vmatpush2.msra.mxu0 0.0
      %821 = vmatprep.subr.mxu0 0.0
      %822 = vmatpush2.msra.mxu0 0.0
      %823 = vmatprep.subr.mxu0 0.0
      %824 = vmatpush2.msra.mxu0 0.0
      %825 = vmatprep.subr.mxu0 0.0
      %826 = vmatpush2.msra.mxu0 0.0
      %827 = vmatprep.subr.mxu0 0.0
      %828 = vmatpush2.msra.mxu0 0.0
      %829 = vmatprep.subr.mxu0 0.0
      %830 = vmatpush2.msra.mxu0 0.0
      %831 = vmatprep.subr.mxu0 0.0
      %832 = vmatpush2.msra.mxu0 0.0
      %833 = vmatprep.subr.mxu0 0.0
      %834 = vmatpush2.msra.mxu0 0.0
      %835 = vmatprep.subr.mxu0 0.0
      %836 = vmatpush2.msra.mxu0 0.0
      %837 = vmatprep.subr.mxu0 0.0
      %838 = vmatpush2.msra.mxu0 0.0
      %839 = vmatprep.subr.mxu0 0.0
      %840 = vmatpush2.msra.mxu0 0.0
      %841 = vmatprep.mubr.f32.mxu0 0.0
      %v842 = vand.u32 %v334, 4294901760
      %843 = vmatmul.mubr.f32.gmra.mxu0 %v842
      %v844 = vpop.f32.mrf.mxu0
      %v845 = vadd.f32 %v738, %v844
      %v846 = vpop.f32.mrf.mxu0
      %847 = vmatprep.mubr.f32.mxu0 0.0
      %v848 = vand.u32 %v337, 4294901760
      %849 = vmatmul.mubr.f32.gmra.mxu0 %v848
      %v850 = vpop.f32.mrf.mxu0
      %v851 = vadd.f32 %v746, %v850
      %v852 = vpop.f32.mrf.mxu0
      %853 = vmatprep.mubr.f32.mxu0 0.0
      %v854 = vand.u32 %v340, 4294901760
      %855 = vmatmul.mubr.f32.gmra.mxu0 %v854
      %v856 = vpop.f32.mrf.mxu0
      %v857 = vadd.f32 %v754, %v856
      %v858 = vpop.f32.mrf.mxu0
      %859 = vmatprep.mubr.f32.mxu0 0.0
      %v860 = vand.u32 %v343, 4294901760
      %861 = vmatmul.mubr.f32.gmra.mxu0 %v860
      %v862 = vpop.f32.mrf.mxu0
      %v863 = vadd.f32 %v762, %v862
      %v864 = vpop.f32.mrf.mxu0
      %865 = vdwg.mxu0
      %866 = vmatprep.subr.mxu0 0.0
      %867 = vmatpush1.msra.mxu0 0.0
      %868 = vmatprep.subr.mxu0 0.0
      %869 = vmatpush1.msra.mxu0 0.0
      %870 = vmatprep.subr.mxu0 0.0
      %871 = vmatpush1.msra.mxu0 0.0
      %872 = vmatprep.subr.mxu0 0.0
      %873 = vmatpush1.msra.mxu0 0.0
      %874 = vmatprep.subr.mxu0 0.0
      %875 = vmatpush1.msra.mxu0 0.0
      %876 = vmatprep.subr.mxu0 0.0
      %877 = vmatpush1.msra.mxu0 0.0
      %878 = vmatprep.subr.mxu0 0.0
      %879 = vmatpush1.msra.mxu0 0.0
      %880 = vmatprep.subr.mxu0 0.0
      %881 = vmatpush1.msra.mxu0 0.0
      %882 = vmatprep.subr.mxu0 0.0
      %883 = vmatpush1.msra.mxu0 0.0
      %884 = vmatprep.subr.mxu0 0.0
      %885 = vmatpush1.msra.mxu0 0.0
      %886 = vmatprep.subr.mxu0 0.0
      %887 = vmatpush1.msra.mxu0 0.0
      %888 = vmatprep.subr.mxu0 0.0
      %889 = vmatpush1.msra.mxu0 0.0
      %890 = vmatprep.subr.mxu0 0.0
      %v891 = vand.u32 %v311, 4294901760
      %892 = vmatpush1.msra.mxu0 %v891
      %893 = vmatprep.subr.mxu0 0.0
      %v894 = vand.u32 %v310, 4294901760
      %895 = vmatpush1.msra.mxu0 %v894
      %896 = vmatprep.subr.mxu0 0.0
      %v897 = vand.u32 %v309, 4294901760
      %898 = vmatpush1.msra.mxu0 %v897
      %899 = vmatprep.subr.mxu0 0.0
      %v900 = vand.u32 %v308, 4294901760
      %901 = vmatpush1.msra.mxu0 %v900
      %902 = vmatprep.subr.mxu0 0.0
      %903 = vmatpush2.msra.mxu0 0.0
      %904 = vmatprep.subr.mxu0 0.0
      %905 = vmatpush2.msra.mxu0 0.0
      %906 = vmatprep.subr.mxu0 0.0
      %907 = vmatpush2.msra.mxu0 0.0
      %908 = vmatprep.subr.mxu0 0.0
      %909 = vmatpush2.msra.mxu0 0.0
      %910 = vmatprep.subr.mxu0 0.0
      %911 = vmatpush2.msra.mxu0 0.0
      %912 = vmatprep.subr.mxu0 0.0
      %913 = vmatpush2.msra.mxu0 0.0
      %914 = vmatprep.subr.mxu0 0.0
      %915 = vmatpush2.msra.mxu0 0.0
      %916 = vmatprep.subr.mxu0 0.0
      %917 = vmatpush2.msra.mxu0 0.0
      %918 = vmatprep.subr.mxu0 0.0
      %919 = vmatpush2.msra.mxu0 0.0
      %920 = vmatprep.subr.mxu0 0.0
      %921 = vmatpush2.msra.mxu0 0.0
      %922 = vmatprep.subr.mxu0 0.0
      %923 = vmatpush2.msra.mxu0 0.0
      %924 = vmatprep.subr.mxu0 0.0
      %925 = vmatpush2.msra.mxu0 0.0
      %926 = vmatprep.subr.mxu0 0.0
      %927 = vmatpush2.msra.mxu0 0.0
      %928 = vmatprep.subr.mxu0 0.0
      %929 = vmatpush2.msra.mxu0 0.0
      %930 = vmatprep.subr.mxu0 0.0
      %931 = vmatpush2.msra.mxu0 0.0
      %932 = vmatprep.subr.mxu0 0.0
      %933 = vmatpush2.msra.mxu0 0.0
      %934 = vmatprep.mubr.f32.mxu0 0.0
      %v935 = vand.u32 %v334, 4294901760
      %936 = vmatmul.mubr.f32.gmra.mxu0 %v935
      %v937 = vpop.f32.mrf.mxu0
      %v938 = vadd.f32 %v845, %v937
      %v939 = vpop.f32.mrf.mxu0
      %940 = vmatprep.mubr.f32.mxu0 0.0
      %v941 = vand.u32 %v337, 4294901760
      %942 = vmatmul.mubr.f32.gmra.mxu0 %v941
      %v943 = vpop.f32.mrf.mxu0
      %v944 = vadd.f32 %v851, %v943
      %v945 = vpop.f32.mrf.mxu0
      %946 = vmatprep.mubr.f32.mxu0 0.0
      %v947 = vand.u32 %v340, 4294901760
      %948 = vmatmul.mubr.f32.gmra.mxu0 %v947
      %v949 = vpop.f32.mrf.mxu0
      %v950 = vadd.f32 %v857, %v949
      %v951 = vpop.f32.mrf.mxu0
      %952 = vmatprep.mubr.f32.mxu0 0.0
      %v953 = vand.u32 %v343, 4294901760
      %954 = vmatmul.mubr.f32.gmra.mxu0 %v953
      %v955 = vpop.f32.mrf.mxu0
      %v956 = vadd.f32 %v863, %v955
      %v957 = vpop.f32.mrf.mxu0
      %958 = vdwg.mxu0
      %959 = vst [vmem:[%s198] sm:$0xff] %v938
      %960 = vst [vmem:[%s198 + $0x8] sm:$0xff] %v944
      %961 = vst [vmem:[%s198 + $0x10] sm:$0xff] %v950
      %962 = vst [vmem:[%s198 + $0x18] sm:$0xff] %v956
      %p963 = scmp.lt.s32.totalorder %s18, 1
      %s964 = scalar_select %p963, %s18, 1
      %p965 = scmp.lt.s32.totalorder %s19, 0
      %s966 = scalar_select %p965, %s19, 0
      %s967 = smul.addr %s964, 4
      %s968 = sadd.s32 %s966, %s967
      %s969 = smul.addr %s968, 8
      %s970 = scalar_lea.vmem %s3, %s969
      // Predicated region
      $region33: #{tpu_custom_call.1} parent=31 // pred_check
        %p971 = pneg %p116
      $region34: #{tpu_custom_call.1} parent=31 // pred_check_branch
        %973 = sbr.rel (%p971) target = $region36
      $region35: #{tpu_custom_call.1} parent=31 // pred_region
        _
      $region36: #{tpu_custom_call.1} parent=31 // pred_fallthru
        _
    $region32: #{tpu_custom_call.1} parent=5 // pred_fallthru
      _
    %p974 = scmp.le.s32.totalorder 2, %s9
    // Predicated region
    $region37: #{tpu_custom_call.1} parent=5 // pred_check
      %p975 = pneg %p974
    $region38: #{tpu_custom_call.1} parent=5 // pred_check_branch
      %977 = sbr.rel (%p975) target = $region40
    $region39: #{tpu_custom_call.1} parent=5 // pred_region
      %s978 = ssub.s32 %s9, 2
      // Predicated region
      $region41: #{tpu_custom_call.1} parent=39 // pred_check
        %p979 = pneg %p122
      $region42: #{tpu_custom_call.1} parent=39 // pred_check_branch
        %981 = sbr.rel (%p979) target = $region44
      $region43: #{tpu_custom_call.1} parent=39 // pred_region
        %p982 = scmp.lt.s32.totalorder %s20, 1
        %s983 = scalar_select %p982, %s20, 1
        %p984 = scmp.lt.s32.totalorder %s21, 0
        %s985 = scalar_select %p984, %s21, 0
        %s986 = smul.addr %s983, 4
        %s987 = sadd.s32 %s985, %s986
        %s988 = smul.addr %s987, 8
        %s989 = scalar_lea.vmem %s3, %s988
      $region44: #{tpu_custom_call.1} parent=39 // pred_fallthru
        _
    $region40: #{tpu_custom_call.1} parent=5 // pred_fallthru
      _
  $region6: #{tpu_custom_call.1} parent=0 // loop_footer
    %s13 = sadd.s32 1, %s9
  $region7: #{tpu_custom_call.1} parent=0 // loop_footer_branch
    %8 = sbr.rel target = $region3
  $region8: #{tpu_custom_call.1} parent=0 // loop_exit
    _

</llo_original>
